<compile_context>
chip_gen: v6e
topology: v6e:2x2x1
jax: 0.10.0
libtpu: 0.0.40
codegen_flags: <defaults>
</compile_context>

<pallas_src>
import functools

import numpy as np
import jax
import jax.numpy as jnp
from jax.experimental import pallas as pl
from jax.experimental.pallas import tpu as pltpu

# ----------------------------------------------------------------------------
# Module configuration (small synthetic shapes, consistent with DGCNN.__init__:
# latent_dim[-1] >= 6 so MaxPool1d is valid, and k chosen so that
# dense_dim == the actual flattened conv2 output size).
# ----------------------------------------------------------------------------
NUM_NODE_FEATS = 4
LATENT_DIM = [8, 8, 8, 16]
K_SORTPOOL = 12
OUTPUT_DIM = 4

TOTAL_LATENT = sum(LATENT_DIM)               # 40
C1, C2 = 16, 32                              # Conv1d channel counts (fixed by module)
K1 = min(5, TOTAL_LATENT)                    # conv1d_params1 kernel size
K2 = min(5, TOTAL_LATENT // 2)               # conv1d_params2 kernel size
_d = max((K_SORTPOOL - 2) // 2 + 1, 1)
DENSE_DIM = max(_d - 5 + 1, 1) * 32          # as computed in DGCNN.__init__

D4 = LATENT_DIM[-1]
L1 = D4 - K1 + 1                             # conv1 output length   (12)
L2 = (L1 - 2) // 2 + 1                       # maxpool output length (6)
L3 = L2 - K2 + 1                             # conv2 output length   (2)

LANES = 128
NUM_SQ = 6                                   # W0..W3, M2, Wo in the square slab
MAX_TILE_N = 1024                            # node-tile rows (bf16 sublane multiple)

# TODO(synk): the adaptive_avg_pool1d branch (taken only when latent_dim[-1] < 5)
# is not implemented; the module's *default* latent_dim=[...,1] would also crash
# PyTorch's MaxPool1d (output length 0), so a valid config is required anyway.


# ----------------------------------------------------------------------------
# Deterministic parameter init (shapes follow DGCNN.__init__).
# ----------------------------------------------------------------------------
def make_params(key):
    dims = [NUM_NODE_FEATS] + LATENT_DIM
    keys = jax.random.split(key, 2 * len(LATENT_DIM) + 6)
    i = 0
    params = {"lin_w": [], "lin_b": []}
    for l in range(len(LATENT_DIM)):
        fan_in = dims[l]
        w = jax.random.normal(keys[i], (dims[l], dims[l + 1]), jnp.float32) / np.sqrt(fan_in)
        i += 1
        b = 0.1 * jax.random.normal(keys[i], (1, dims[l + 1]), jnp.float32)
        i += 1
        params["lin_w"].append(w)
        params["lin_b"].append(b)
    params["conv1_w"] = 0.2 * jax.random.normal(keys[i], (C1, 1, K1), jnp.float32); i += 1
    params["conv1_b"] = 0.1 * jax.random.normal(keys[i], (1, C1), jnp.float32); i += 1
    params["conv2_w"] = 0.1 * jax.random.normal(keys[i], (C2, C1, K2), jnp.float32); i += 1
    params["conv2_b"] = 0.1 * jax.random.normal(keys[i], (1, C2), jnp.float32); i += 1
    params["out_w"] = 0.1 * jax.random.normal(keys[i], (OUTPUT_DIM, DENSE_DIM), jnp.float32); i += 1
    params["out_b"] = 0.1 * jax.random.normal(keys[i], (1, OUTPUT_DIM), jnp.float32); i += 1
    return params


def _round_up(v, m):
    return -(-v // m) * m


# ----------------------------------------------------------------------------
# Host-side glue: readout pooling matrix (mean over the first k nodes of each
# graph, exactly matching `h[batch==i][:k].mean(0)` with PyTorch's global
# k = min(self.k, n_nodes // num_graphs) and per-graph truncation).
# Fully vectorised (no per-node Python loop).
# NOTE: a graph with zero selected nodes yields a zero pooled row (PyTorch
# would produce NaN from an empty mean) -- documented semantic divergence.
# ----------------------------------------------------------------------------
def build_pool_matrix(batch, n_nodes, k_param):
    batch = np.asarray(batch, np.int64)
    num_graphs = int(batch.max()) + 1 if batch.size > 0 else 1
    max_nodes = n_nodes // num_graphs if batch.size > 0 else 1
    k_eff = min(k_param, max_nodes)
    # within-graph rank of every node, preserving input order
    order = np.argsort(batch, kind="stable")
    sorted_batch = batch[order]
    group_start = np.searchsorted(sorted_batch, sorted_batch, side="left")
    rank = np.empty(n_nodes, np.int64)
    rank[order] = np.arange(n_nodes) - group_start
    sel = rank < k_eff
    counts = np.bincount(batch[sel], minlength=num_graphs)
    P = np.zeros((num_graphs, n_nodes), np.float32)
    idx = np.nonzero(sel)[0]
    if idx.size > 0:
        P[batch[idx], idx] = 1.0 / np.maximum(counts[batch[idx]], 1)
    return P


# ----------------------------------------------------------------------------
# Host-side packing.
# pack_weights depends only on params -> build ONCE and reuse across calls.
# ----------------------------------------------------------------------------
def pack_weights(params):
    dims = [NUM_NODE_FEATS] + LATENT_DIM

    # 6 square (128,128) slots: 4 x (Linear+bias via ones column), M2, Wo.
    sq = np.zeros((NUM_SQ, LANES, LANES), np.float32)
    for l in range(len(LATENT_DIM)):
        dp, dn = dims[l], dims[l + 1]
        sq[l, :dp, :dn] = np.asarray(params["lin_w"][l])
        sq[l, dp, :dn] = np.asarray(params["lin_b"][l])[0]
        sq[l, dp, dn] = 1.0                                   # propagate ones column

    # Conv1d(1,C1,K1)+ReLU+MaxPool1d(2,2): even/odd Toeplitz mats FUSED into one
    # (128, 256) RHS (fills the 256-wide MXU on v6e/v7x in a single pass).
    W1 = np.asarray(params["conv1_w"])          # (C1, 1, K1)
    b1 = np.asarray(params["conv1_b"])[0]       # (C1,)
    m1 = np.zeros((LANES, 2 * LANES), np.float32)
    for half, off in ((0, 0), (1, 1)):
        base = half * LANES
        for s in range(L2):
            t0 = 2 * s + off
            for j in range(K1):
                m1[t0 + j, base + s * C1: base + (s + 1) * C1] = W1[:, 0, j]
        m1[D4, base: base + L2 * C1] = np.tile(b1, L2)
        m1[D4, base + L2 * C1] = 1.0                          # keep ones column alive

    # Conv1d(C1,C2,K2)+ReLU as a Toeplitz matmul; output layout t*C2 + o.
    W2 = np.asarray(params["conv2_w"])          # (C2, C1, K2)
    b2 = np.asarray(params["conv2_b"])[0]       # (C2,)
    for t in range(L3):
        for j in range(K2):
            sq[4, (t + j) * C1:(t + j + 1) * C1, t * C2:(t + 1) * C2] = W2[:, :, j].T
    sq[4, L2 * C1, :L3 * C2] = np.tile(b2, L3)
    sq[4, L2 * C1, L3 * C2] = 1.0

    # Final Linear: PyTorch flattens channel-major (o*L3 + t); our a2 layout is
    # position-major (t*C2 + o) -> permute the weight rows; fold bias as last row.
    Wo = np.asarray(params["out_w"])            # (OUTPUT_DIM, DENSE_DIM)
    Wo_k = Wo.T.reshape(C2, L3, OUTPUT_DIM).transpose(1, 0, 2).reshape(L3 * C2, OUTPUT_DIM)
    sq[5, :L3 * C2, :OUTPUT_DIM] = Wo_k
    sq[5, L3 * C2, :OUTPUT_DIM] = np.asarray(params["out_b"])[0]

    return jnp.asarray(sq, jnp.bfloat16), jnp.asarray(m1, jnp.bfloat16)


def pack_inputs(x, batch):
    x = np.asarray(x, np.float32)
    n_nodes = x.shape[0]
    P = build_pool_matrix(batch, n_nodes, K_SORTPOOL)
    B = P.shape[0]

    # bf16 tiles: sublane (row) pads are multiples of 16.
    n_min = max(_round_up(n_nodes, 16), 16)
    tile_n = min(MAX_TILE_N, n_min)
    n_pad = _round_up(n_min, tile_n)
    b_pad = max(_round_up(B, 16), 16)

    # x carries its ones column (bias propagation); padded node rows are
    # all-zero so they produce zero h and are ignored by the zero P columns.
    x_pad = np.zeros((n_pad, LANES), np.float32)
    x_pad[:n_nodes, :NUM_NODE_FEATS] = x
    x_pad[:n_nodes, NUM_NODE_FEATS] = 1.0

    p_pad = np.zeros((b_pad, n_pad), np.float32)
    p_pad[:B, :n_nodes] = P

    return (jnp.asarray(x_pad, jnp.bfloat16), jnp.asarray(p_pad, jnp.bfloat16),
            B, b_pad, tile_n)


# ----------------------------------------------------------------------------
# Pallas kernel: node-tiled grid ("arbitrary" reduction axis), bf16 MXU inputs,
# f32 accumulation, f32 elementwise (relu/max), lane-dense f32 output.
# ----------------------------------------------------------------------------
def _dgcnn_kernel(x_ref, p_ref, wsq_ref, wc1_ref, out_ref, acc_ref):
    t = pl.program_id(0)

    @pl.when(t == 0)
    def _init():
        acc_ref[...] = jnp.zeros_like(acc_ref)

    # --- node MLP: 4 x (Linear + ReLU); biases live in the augmented weights ---
    h = x_ref[...]                                                     # (tile_n, 128) bf16
    for i in range(4):
        h = jnp.maximum(
            jnp.dot(h, wsq_ref[i], preferred_element_type=jnp.float32), 0.0
        ).astype(jnp.bfloat16)

    # --- graph readout: mean over first-k nodes per graph, accumulated in f32 ---
    acc_ref[...] += jnp.dot(p_ref[...], h, preferred_element_type=jnp.float32)

    @pl.when(t == pl.num_programs(0) - 1)
    def _finalize():
        pooled = acc_ref[...].astype(jnp.bfloat16)                     # (b_pad, 128)
        # Conv1d(1,16,K1) + ReLU + MaxPool1d(2,2): one fused 128x256 Toeplitz RHS;
        # relu(max(even, odd)) == max(relu(even), relu(odd)) since relu is monotone.
        a_eo = jnp.dot(pooled, wc1_ref[...], preferred_element_type=jnp.float32)
        mp = jnp.maximum(jnp.maximum(a_eo[:, :LANES], a_eo[:, LANES:]), 0.0
                         ).astype(jnp.bfloat16)
        # Conv1d(16,32,K2) + ReLU (Toeplitz matmul).
        a2 = jnp.maximum(
            jnp.dot(mp, wsq_ref[4], preferred_element_type=jnp.float32), 0.0
        ).astype(jnp.bfloat16)
        # flatten + output Linear (bias folded); lane-dense (b_pad, 128) store.
        out_ref[...] = jnp.dot(
            a2, wsq_ref[5], preferred_element_type=jnp.float32
        ).astype(out_ref.dtype)


@functools.lru_cache(maxsize=None)
def _build_forward(n_pad, tile_n, b_pad):
    num_tiles = n_pad // tile_n
    grid_spec = pltpu.PrefetchScalarGridSpec(
        num_scalar_prefetch=0,
        grid=(num_tiles,),
        in_specs=[
            pl.BlockSpec((tile_n, LANES), lambda t: (t, 0)),              # x node tile
            pl.BlockSpec((b_pad, tile_n), lambda t: (0, t)),              # P node slice
            pl.BlockSpec((NUM_SQ, LANES, LANES), lambda t: (0, 0, 0)),    # square weights
            pl.BlockSpec((LANES, 2 * LANES), lambda t: (0, 0)),           # fused conv1
        ],
        out_specs=pl.BlockSpec((b_pad, LANES), lambda t: (0, 0)),
        scratch_shapes=[pltpu.VMEM((b_pad, LANES), jnp.float32)],
    )
    call = pl.pallas_call(
        _dgcnn_kernel,
        out_shape=jax.ShapeDtypeStruct((b_pad, LANES), jnp.float32),
        grid_spec=grid_spec,
        compiler_params=pltpu.CompilerParams(
            dimension_semantics=("arbitrary",),
            vmem_limit_bytes=32 * 1024 * 1024,
        ),
    )
    return jax.jit(call)


def dgcnn_forward(params, x, edge_index, batch, packed_weights=None):
    # edge_index is accepted for signature parity but (as in the PyTorch code)
    # is never used in the forward pass.
    del edge_index
    assert D4 >= 5, "adaptive_avg_pool1d path not implemented (see TODO above)"
    assert L1 >= 2, "MaxPool1d(2,2) needs conv1 output length >= 2"
    assert L2 >= K2
    if OUTPUT_DIM > 0:
        assert C2 * L3 == DENSE_DIM, "config must make dense_dim match the data flow"

    if packed_weights is None:
        packed_weights = pack_weights(params)      # hoist: build once per params
    wsq, wc1 = packed_weights

    x_bf, p_bf, B, b_pad, tile_n = pack_inputs(x, batch)
    fwd = _build_forward(int(x_bf.shape[0]), tile_n, b_pad)
    out = fwd(x_bf, p_bf, wsq, wc1)
    return out[:B, :OUTPUT_DIM]


# ----------------------------------------------------------------------------
# Numpy reference mirroring the PyTorch forward, with bf16 rounding applied at
# the same points as the kernel (params, inputs and inter-matmul activations),
# so the comparison stays tight despite the bf16 MXU path.
# ----------------------------------------------------------------------------
def _q_bf16(a):
    return np.asarray(jnp.asarray(np.asarray(a, np.float32), jnp.bfloat16).astype(jnp.float32))


def reference_numpy(params, x, batch):
    q = _q_bf16
    h = q(x).astype(np.float64)
    for w, b in zip(params["lin_w"], params["lin_b"]):
        h = q(np.maximum(h @ q(w).astype(np.float64) + q(b).astype(np.float64), 0.0)
              ).astype(np.float64)
    num_graphs = int(batch.max()) + 1
    max_nodes = h.shape[0] // num_graphs
    k_eff = min(K_SORTPOOL, max_nodes)
    pooled_rows = []
    for i in range(num_graphs):
        rows = h[batch == i][:k_eff]
        pooled_rows.append(rows.sum(0) * float(q(1.0 / rows.shape[0])))
    pooled = q(np.stack(pooled_rows)).astype(np.float64)
    B, D = pooled.shape
    W1 = q(params["conv1_w"]); b1 = q(params["conv1_b"])[0]
    l1 = D - K1 + 1
    c1 = np.zeros((B, C1, l1))
    for t in range(l1):
        c1[:, :, t] = pooled[:, t:t + K1] @ W1[:, 0, :].T.astype(np.float64) + b1
    c1 = np.maximum(c1, 0.0)
    l2 = (l1 - 2) // 2 + 1
    mp = np.zeros((B, C1, l2))
    for t in range(l2):
        mp[:, :, t] = np.maximum(c1[:, :, 2 * t], c1[:, :, 2 * t + 1])
    mp = q(mp).astype(np.float64)
    W2 = q(params["conv2_w"]); b2 = q(params["conv2_b"])[0]
    l3 = l2 - K2 + 1
    c2 = np.zeros((B, C2, l3))
    for t in range(l3):
        c2[:, :, t] = np.einsum('bcj,ocj->bo', mp[:, :, t:t + K2], W2) + b2
    c2 = np.maximum(c2, 0.0)
    flat = q(c2.reshape(B, -1)).astype(np.float64)
    return flat @ q(params["out_w"]).T.astype(np.float64) + q(params["out_b"])[0]


if __name__ == "__main__":
    key = jax.random.PRNGKey(0)
    kx, kp = jax.random.split(key)
    params = make_params(kp)

    N = 16                                                 # total nodes, 2 graphs x 8 nodes
    x = jax.random.normal(kx, (N, NUM_NODE_FEATS), jnp.float32)
    batch = np.repeat(np.arange(2), N // 2).astype(np.int32)
    edge_index = np.stack([np.arange(N), (np.arange(N) + 1) % N]).astype(np.int32)  # unused

    packed_weights = pack_weights(params)                  # built once per params
    out = dgcnn_forward(params, x, edge_index, batch, packed_weights=packed_weights)
    out = jax.block_until_ready(out)

    ref = reference_numpy(params, np.asarray(x), batch)
    assert out.shape == (2, OUTPUT_DIM)
    assert np.allclose(np.asarray(out, np.float64), ref, atol=5e-3, rtol=5e-3), (
        np.asarray(out), ref)
    print("KERNEL_OK")
</pallas_src>

<mosaic_0001>
module attributes {stable_mosaic.version = 11 : i64} {
  func.func @_dgcnn_kernel(%arg0: i32, %arg1: memref<16x128xbf16, #tpu.memory_space<vmem>>, %arg2: memref<16x16xbf16, #tpu.memory_space<vmem>>, %arg3: memref<6x128x128xbf16, #tpu.memory_space<vmem>>, %arg4: memref<128x256xbf16, #tpu.memory_space<vmem>>, %arg5: memref<16x128xf32, #tpu.memory_space<vmem>>, %arg6: memref<16x128xf32, #tpu.memory_space<vmem>>) attributes {dimension_semantics = [#tpu.dimension_semantics<arbitrary>], iteration_bounds = array<i64: 1>, scalar_prefetch = 0 : i64, scratch_operands = 1 : i64, tpu.core_type = #tpu.core_type<tc>, window_params = [{transform_indices = @transform_0, window_bounds = array<i64: 16, 128>}, {transform_indices = @transform_1, window_bounds = array<i64: 16, 16>}, {pipeline_mode = #tpu.pipeline_mode<synchronous>, transform_indices = @transform_2, window_bounds = array<i64: 6, 128, 128>}, {pipeline_mode = #tpu.pipeline_mode<synchronous>, transform_indices = @transform_3, window_bounds = array<i64: 128, 256>}, {pipeline_mode = #tpu.pipeline_mode<synchronous>, transform_indices = @transform_4, window_bounds = array<i64: 16, 128>}]} {
    %c0_i32 = arith.constant 0 : i32
    %0 = arith.cmpi eq, %arg0, %c0_i32 : i32
    %1 = arith.extui %0 : i1 to i32
    %c0_i32_0 = arith.constant 0 : i32
    %2 = arith.cmpi ne, %1, %c0_i32_0 : i32
    scf.if %2 {
      %cst_27 = arith.constant 0.000000e+00 : f32
      %36 = vector.broadcast %cst_27 : f32 to vector<16x128xf32>
      %c0_28 = arith.constant 0 : index
      %c0_29 = arith.constant 0 : index
      %37 = vector.load %arg6[%c0_28, %c0_29] : memref<16x128xf32, #tpu.memory_space<vmem>>, vector<16x128xf32>
      tpu.vector_store %arg6[%c0_28, %c0_29], %36 {strides = array<i32>} : memref<16x128xf32, #tpu.memory_space<vmem>>, vector<16x128xf32>,
    } else {
    }
    %c0 = arith.constant 0 : index
    %c0_1 = arith.constant 0 : index
    %3 = vector.load %arg1[%c0, %c0_1] : memref<16x128xbf16, #tpu.memory_space<vmem>>, vector<16x128xbf16>
    %c0_2 = arith.constant 0 : index
    %c0_3 = arith.constant 0 : index
    %c0_4 = arith.constant 0 : index
    %4 = vector.load %arg3[%c0_2, %c0_3, %c0_4] : memref<6x128x128xbf16, #tpu.memory_space<vmem>>, vector<1x128x128xbf16>
    %5 = vector.shape_cast %4 : vector<1x128x128xbf16> to vector<128x128xbf16>
    %cst = arith.constant dense<0.000000e+00> : vector<16x128xf32>
    %6 = tpu.matmul %3, %5, %cst {dimension_numbers = #tpu.dot_dimension_numbers<[1], [0], [0], [1], [0, 0, 1, 1], [], []>} : vector<16x128xbf16>, vector<128x128xbf16>, vector<16x128xf32> -> vector<16x128xf32>
    %cst_5 = arith.constant 0.000000e+00 : f32
    %7 = vector.broadcast %cst_5 : f32 to vector<16x128xf32>
    %8 = arith.maximumf %6, %7 : vector<16x128xf32>
    %9 = arith.truncf %8 : vector<16x128xf32> to vector<16x128xbf16>
    %c1 = arith.constant 1 : index
    %c0_6 = arith.constant 0 : index
    %c0_7 = arith.constant 0 : index
    %10 = vector.load %arg3[%c1, %c0_6, %c0_7] : memref<6x128x128xbf16, #tpu.memory_space<vmem>>, vector<1x128x128xbf16>
    %11 = vector.shape_cast %10 : vector<1x128x128xbf16> to vector<128x128xbf16>
    %cst_8 = arith.constant dense<0.000000e+00> : vector<16x128xf32>
    %12 = tpu.matmul %9, %11, %cst_8 {dimension_numbers = #tpu.dot_dimension_numbers<[1], [0], [0], [1], [0, 0, 1, 1], [], []>} : vector<16x128xbf16>, vector<128x128xbf16>, vector<16x128xf32> -> vector<16x128xf32>
    %cst_9 = arith.constant 0.000000e+00 : f32
    %13 = vector.broadcast %cst_9 : f32 to vector<16x128xf32>
    %14 = arith.maximumf %12, %13 : vector<16x128xf32>
    %15 = arith.truncf %14 : vector<16x128xf32> to vector<16x128xbf16>
    %c2 = arith.constant 2 : index
    %c0_10 = arith.constant 0 : index
    %c0_11 = arith.constant 0 : index
    %16 = vector.load %arg3[%c2, %c0_10, %c0_11] : memref<6x128x128xbf16, #tpu.memory_space<vmem>>, vector<1x128x128xbf16>
    %17 = vector.shape_cast %16 : vector<1x128x128xbf16> to vector<128x128xbf16>
    %cst_12 = arith.constant dense<0.000000e+00> : vector<16x128xf32>
    %18 = tpu.matmul %15, %17, %cst_12 {dimension_numbers = #tpu.dot_dimension_numbers<[1], [0], [0], [1], [0, 0, 1, 1], [], []>} : vector<16x128xbf16>, vector<128x128xbf16>, vector<16x128xf32> -> vector<16x128xf32>
    %cst_13 = arith.constant 0.000000e+00 : f32
    %19 = vector.broadcast %cst_13 : f32 to vector<16x128xf32>
    %20 = arith.maximumf %18, %19 : vector<16x128xf32>
    %21 = arith.truncf %20 : vector<16x128xf32> to vector<16x128xbf16>
    %c3 = arith.constant 3 : index
    %c0_14 = arith.constant 0 : index
    %c0_15 = arith.constant 0 : index
    %22 = vector.load %arg3[%c3, %c0_14, %c0_15] : memref<6x128x128xbf16, #tpu.memory_space<vmem>>, vector<1x128x128xbf16>
    %23 = vector.shape_cast %22 : vector<1x128x128xbf16> to vector<128x128xbf16>
    %cst_16 = arith.constant dense<0.000000e+00> : vector<16x128xf32>
    %24 = tpu.matmul %21, %23, %cst_16 {dimension_numbers = #tpu.dot_dimension_numbers<[1], [0], [0], [1], [0, 0, 1, 1], [], []>} : vector<16x128xbf16>, vector<128x128xbf16>, vector<16x128xf32> -> vector<16x128xf32>
    %cst_17 = arith.constant 0.000000e+00 : f32
    %25 = vector.broadcast %cst_17 : f32 to vector<16x128xf32>
    %26 = arith.maximumf %24, %25 : vector<16x128xf32>
    %27 = arith.truncf %26 : vector<16x128xf32> to vector<16x128xbf16>
    %c0_18 = arith.constant 0 : index
    %c0_19 = arith.constant 0 : index
    %28 = vector.load %arg6[%c0_18, %c0_19] : memref<16x128xf32, #tpu.memory_space<vmem>>, vector<16x128xf32>
    %c0_20 = arith.constant 0 : index
    %c0_21 = arith.constant 0 : index
    %29 = vector.load %arg2[%c0_20, %c0_21] : memref<16x16xbf16, #tpu.memory_space<vmem>>, vector<16x16xbf16>
    %cst_22 = arith.constant dense<0.000000e+00> : vector<16x128xf32>
    %30 = tpu.matmul %29, %27, %cst_22 {dimension_numbers = #tpu.dot_dimension_numbers<[1], [0], [0], [1], [0, 0, 1, 1], [], []>} : vector<16x16xbf16>, vector<16x128xbf16>, vector<16x128xf32> -> vector<16x128xf32>
    %31 = arith.addf %28, %30 : vector<16x128xf32>
    %c0_23 = arith.constant 0 : index
    %c0_24 = arith.constant 0 : index
    %32 = vector.load %arg6[%c0_23, %c0_24] : memref<16x128xf32, #tpu.memory_space<vmem>>, vector<16x128xf32>
    tpu.vector_store %arg6[%c0_23, %c0_24], %31 {strides = array<i32>} : memref<16x128xf32, #tpu.memory_space<vmem>>, vector<16x128xf32>,
    %c0_i32_25 = arith.constant 0 : i32
    %33 = arith.cmpi eq, %arg0, %c0_i32_25 : i32
    %34 = arith.extui %33 : i1 to i32
    %c0_i32_26 = arith.constant 0 : i32
    %35 = arith.cmpi ne, %34, %c0_i32_26 : i32
    scf.if %35 {
      %c0_27 = arith.constant 0 : index
      %c0_28 = arith.constant 0 : index
      %36 = vector.load %arg6[%c0_27, %c0_28] : memref<16x128xf32, #tpu.memory_space<vmem>>, vector<16x128xf32>
      %37 = arith.truncf %36 : vector<16x128xf32> to vector<16x128xbf16>
      %c0_29 = arith.constant 0 : index
      %c0_30 = arith.constant 0 : index
      %38 = vector.load %arg4[%c0_29, %c0_30] : memref<128x256xbf16, #tpu.memory_space<vmem>>, vector<128x256xbf16>
      %cst_31 = arith.constant dense<0.000000e+00> : vector<16x256xf32>
      %39 = tpu.matmul %37, %38, %cst_31 {dimension_numbers = #tpu.dot_dimension_numbers<[1], [0], [0], [1], [0, 0, 1, 1], [], []>} : vector<16x128xbf16>, vector<128x256xbf16>, vector<16x256xf32> -> vector<16x256xf32>
      %40 = vector.extract_strided_slice %39 {offsets = [0, 0], sizes = [16, 128], strides = [1, 1]} : vector<16x256xf32> to vector<16x128xf32>
      %41 = vector.extract_strided_slice %39 {offsets = [0, 128], sizes = [16, 128], strides = [1, 1]} : vector<16x256xf32> to vector<16x128xf32>
      %42 = arith.maximumf %40, %41 : vector<16x128xf32>
      %cst_32 = arith.constant 0.000000e+00 : f32
      %43 = vector.broadcast %cst_32 : f32 to vector<16x128xf32>
      %44 = arith.maximumf %42, %43 : vector<16x128xf32>
      %45 = arith.truncf %44 : vector<16x128xf32> to vector<16x128xbf16>
      %c4 = arith.constant 4 : index
      %c0_33 = arith.constant 0 : index
      %c0_34 = arith.constant 0 : index
      %46 = vector.load %arg3[%c4, %c0_33, %c0_34] : memref<6x128x128xbf16, #tpu.memory_space<vmem>>, vector<1x128x128xbf16>
      %47 = vector.shape_cast %46 : vector<1x128x128xbf16> to vector<128x128xbf16>
      %cst_35 = arith.constant dense<0.000000e+00> : vector<16x128xf32>
      %48 = tpu.matmul %45, %47, %cst_35 {dimension_numbers = #tpu.dot_dimension_numbers<[1], [0], [0], [1], [0, 0, 1, 1], [], []>} : vector<16x128xbf16>, vector<128x128xbf16>, vector<16x128xf32> -> vector<16x128xf32>
      %cst_36 = arith.constant 0.000000e+00 : f32
      %49 = vector.broadcast %cst_36 : f32 to vector<16x128xf32>
      %50 = arith.maximumf %48, %49 : vector<16x128xf32>
      %51 = arith.truncf %50 : vector<16x128xf32> to vector<16x128xbf16>
      %c5 = arith.constant 5 : index
      %c0_37 = arith.constant 0 : index
      %c0_38 = arith.constant 0 : index
      %52 = vector.load %arg3[%c5, %c0_37, %c0_38] : memref<6x128x128xbf16, #tpu.memory_space<vmem>>, vector<1x128x128xbf16>
      %53 = vector.shape_cast %52 : vector<1x128x128xbf16> to vector<128x128xbf16>
      %cst_39 = arith.constant dense<0.000000e+00> : vector<16x128xf32>
      %54 = tpu.matmul %51, %53, %cst_39 {dimension_numbers = #tpu.dot_dimension_numbers<[1], [0], [0], [1], [0, 0, 1, 1], [], []>} : vector<16x128xbf16>, vector<128x128xbf16>, vector<16x128xf32> -> vector<16x128xf32>
      %c0_40 = arith.constant 0 : index
      %c0_41 = arith.constant 0 : index
      %55 = vector.load %arg5[%c0_40, %c0_41] : memref<16x128xf32, #tpu.memory_space<vmem>>, vector<16x128xf32>
      tpu.vector_store %arg5[%c0_40, %c0_41], %54 {strides = array<i32>} : memref<16x128xf32, #tpu.memory_space<vmem>>, vector<16x128xf32>,
    } else {
    }
    return
  }
  func.func @transform_0(%arg0: i32) -> (i32, i32) {
    %c0_i32 = arith.constant 0 : i32
    %c0_i32_0 = arith.constant 0 : i32
    return %arg0, %c0_i32 : i32, i32
  }
  func.func @transform_1(%arg0: i32) -> (i32, i32) {
    %c0_i32 = arith.constant 0 : i32
    %c0_i32_0 = arith.constant 0 : i32
    return %c0_i32, %arg0 : i32, i32
  }
  func.func @transform_2(%arg0: i32) -> (i32, i32, i32) {
    %c0_i32 = arith.constant 0 : i32
    %c0_i32_0 = arith.constant 0 : i32
    %c0_i32_1 = arith.constant 0 : i32
    %c0_i32_2 = arith.constant 0 : i32
    return %c0_i32, %c0_i32_0, %c0_i32_1 : i32, i32, i32
  }
  func.func @transform_3(%arg0: i32) -> (i32, i32) {
    %c0_i32 = arith.constant 0 : i32
    %c0_i32_0 = arith.constant 0 : i32
    %c0_i32_1 = arith.constant 0 : i32
    return %c0_i32, %c0_i32_0 : i32, i32
  }
  func.func @transform_4(%arg0: i32) -> (i32, i32) {
    %c0_i32 = arith.constant 0 : i32
    %c0_i32_0 = arith.constant 0 : i32
    %c0_i32_1 = arith.constant 0 : i32
    return %c0_i32, %c0_i32_0 : i32, i32
  }
}

</mosaic_0001>

<llo_original>
// kernel: tpu_custom_call.1
$region0: #{tpu_custom_call.1}
  #allocation0 [shape = 'u32[]', space=smem, size = 0x4, offset = 0x4, fixed_abs, tag = 'smem constant byte address 0x4 - core index']
  #allocation1 [shape = 'u32[144,128]{1,0:T(1,128)}', space=vmem, size = 0x12000, scoped, tag = 'internal scratch']
  #allocation2 [shape = 'f32[16,128]{1,0:T(8,128)}', space=vmem, size = 0x2000, scoped, tag = 'scratch operand']
  %s0 = inlined_call_operand.hbm [shape: bf16[16,128], index: 0, kind: input, shape index: {}]
  %s1 = inlined_call_operand.hbm [shape: bf16[16,16], index: 1, kind: input, shape index: {}]
  %s2 = inlined_call_operand.hbm [shape: bf16[6,128,128], index: 2, kind: input, shape index: {}]
  %s3 = inlined_call_operand.hbm [shape: bf16[128,256], index: 3, kind: input, shape index: {}]
  %s4 = inlined_call_operand.hbm [shape: f32[16,128], index: 4, kind: output, shape index: {}]
  %s5 = sld [smem:[#allocation0]]
  $region50: #{tpu_custom_call.1} parent=0
    _
  %s7 = ssub.s32 1, %s5
  %s8 = scalar_select 0, %s7, %s5
  $region1: #{tpu_custom_call.1} parent=0
    #allocation3 [shape = 'u8[4096]{0}', space=vmem, size = 0x1000, scoped, tag = 'input window, operand 0, single buffered']
    #allocation4 [shape = 's32[1]{0}', space=sflag, size = 0x4, scoped, tag = 'scoped memory for tpu_custom_call.1']
    #allocation5 [shape = 's32[1]{0}', space=sflag, size = 0x4, scoped, tag = 'scoped memory for tpu_custom_call.1']
    #allocation6 [shape = 'u8[4096]{0}', space=vmem, size = 0x1000, scoped, tag = 'input window, operand 1, single buffered']
    #allocation7 [shape = 's32[1]{0}', space=sflag, size = 0x4, scoped, tag = 'scoped memory for tpu_custom_call.1']
    #allocation8 [shape = 'u8[196608]{0}', space=vmem, size = 0x30000, scoped, tag = 'input window, operand 2, single buffered']
    #allocation9 [shape = 'u8[65536]{0}', space=vmem, size = 0x10000, scoped, tag = 'input window, operand 3, single buffered']
    #allocation10 [shape = 's32[1]{0}', space=sflag, size = 0x4, scoped, tag = 'scoped memory for tpu_custom_call.1']
    #allocation11 [shape = 'u8[8192]{0}', space=vmem, size = 0x2000, scoped, tag = 'output window, operand 0, single buffered']
    %9 = vsyncpa [#allocation4], 0
    %10 = vsyncpa [#allocation7], 0
    %11 = vsyncpa [#allocation10], 0
    %12 = vsyncpa [#allocation5], 0
    // Predicated region
    $region2: #{tpu_custom_call.1} parent=1 // pred_check
      _
    $region3: #{tpu_custom_call.1} parent=1 // pred_check_branch
      %14 = sbr.rel (0) target = $region5
    $region4: #{tpu_custom_call.1} parent=1 // pred_region
      %s16 = ssub.s32 128, 128
      %17 = vsyncadd [#allocation4], %s16
      %s18 = sshll.u32 [#allocation3], 4
      %s19 = int_to_ptr.vmem [resolvable:$true] %s18
      %24 = dma.hbm_to_vmem [thread:$0]  %s0, 128, %s19, [#allocation4], 64, 64, 4
    $region5: #{tpu_custom_call.1} parent=1 // pred_fallthru
      _
    // Predicated region
    $region6: #{tpu_custom_call.1} parent=1 // pred_check
      _
    $region7: #{tpu_custom_call.1} parent=1 // pred_check_branch
      %26 = sbr.rel (0) target = $region9
    $region8: #{tpu_custom_call.1} parent=1 // pred_region
      %s28 = ssub.s32 128, 128
      %29 = vsyncadd [#allocation7], %s28
      %s30 = sshll.u32 [#allocation6], 4
      %s31 = int_to_ptr.vmem [resolvable:$true] %s30
      %36 = dma.hbm_to_vmem [thread:$0]  %s1, 128, %s31, [#allocation7], 64, 64, 4
    $region9: #{tpu_custom_call.1} parent=1 // pred_fallthru
      _
    // Predicated region
    $region10: #{tpu_custom_call.1} parent=1 // pred_check
      _
    $region11: #{tpu_custom_call.1} parent=1 // pred_check_branch
      %38 = sbr.rel (0) target = $region13
    $region12: #{tpu_custom_call.1} parent=1 // pred_region
      %s40 = ssub.s32 6144, 6144
      %41 = vsyncadd [#allocation7], %s40
      %s42 = sshll.u32 [#allocation8], 4
      %s43 = int_to_ptr.vmem [resolvable:$true] %s42
      %48 = dma.hbm_to_vmem [thread:$0]  %s2, 6144, %s43, [#allocation7], 64, 64, 4
    $region13: #{tpu_custom_call.1} parent=1 // pred_fallthru
      _
    // Predicated region
    $region14: #{tpu_custom_call.1} parent=1 // pred_check
      _
    $region15: #{tpu_custom_call.1} parent=1 // pred_check_branch
      %50 = sbr.rel (0) target = $region17
    $region16: #{tpu_custom_call.1} parent=1 // pred_region
      %s52 = ssub.s32 2048, 2048
      %53 = vsyncadd [#allocation10], %s52
      %s54 = sshll.u32 [#allocation9], 4
      %s55 = int_to_ptr.vmem [resolvable:$true] %s54
      %60 = dma.hbm_to_vmem [thread:$0]  %s3, 2048, %s55, [#allocation10], 128, 128, 8
    $region17: #{tpu_custom_call.1} parent=1 // pred_fallthru
      _
    // Predicated region
    $region18: #{tpu_custom_call.1} parent=1 // pred_check
      _
    $region19: #{tpu_custom_call.1} parent=1 // pred_check_branch
      %62 = sbr.rel (0) target = $region21
    $region20: #{tpu_custom_call.1} parent=1 // pred_region
      %63 = dma.done [#allocation4], 128
    $region21: #{tpu_custom_call.1} parent=1 // pred_fallthru
      _
    // Predicated region
    $region22: #{tpu_custom_call.1} parent=1 // pred_check
      _
    $region23: #{tpu_custom_call.1} parent=1 // pred_check_branch
      %65 = sbr.rel (0) target = $region25
    $region24: #{tpu_custom_call.1} parent=1 // pred_region
      %66 = dma.done [#allocation7], 128
    $region25: #{tpu_custom_call.1} parent=1 // pred_fallthru
      _
    // Predicated region
    $region26: #{tpu_custom_call.1} parent=1 // pred_check
      _
    $region27: #{tpu_custom_call.1} parent=1 // pred_check_branch
      %68 = sbr.rel (0) target = $region29
    $region28: #{tpu_custom_call.1} parent=1 // pred_region
      %69 = dma.done [#allocation7], 6144
    $region29: #{tpu_custom_call.1} parent=1 // pred_fallthru
      _
    // Predicated region
    $region30: #{tpu_custom_call.1} parent=1 // pred_check
      _
    $region31: #{tpu_custom_call.1} parent=1 // pred_check_branch
      %71 = sbr.rel (0) target = $region33
    $region32: #{tpu_custom_call.1} parent=1 // pred_region
      %72 = dma.done [#allocation10], 2048
    $region33: #{tpu_custom_call.1} parent=1 // pred_fallthru
      _
    %p74 = scmp.eq.s32.totalorder 0, 0
    // Predicated region
    $region34: #{tpu_custom_call.1} parent=1 // pred_check
      %p75 = pneg %p74
    $region35: #{tpu_custom_call.1} parent=1 // pred_check_branch
      %77 = sbr.rel (%p75) target = $region37
    $region36: #{tpu_custom_call.1} parent=1 // pred_region
      %78 = vst [vmem:[#allocation2] sm:$0xff] 0.0
      %79 = vst [vmem:[#allocation2 + $0x8] sm:$0xff] 0.0
    $region37: #{tpu_custom_call.1} parent=1 // pred_fallthru
      _
    %v80 = vld [vmem:[#allocation3] sm:$0xf]
    %v81 = vld [vmem:[#allocation3 + $0x4] sm:$0xf]
    %v82 = vld [vmem:[#allocation8] sm:$0xf]
    %v83 = vld [vmem:[#allocation8 + $0x4] sm:$0xf]
    %v84 = vld [vmem:[#allocation8 + $0x8] sm:$0xf]
    %v85 = vld [vmem:[#allocation8 + $0xc] sm:$0xf]
    %v86 = vld [vmem:[#allocation8 + $0x10] sm:$0xf]
    %v87 = vld [vmem:[#allocation8 + $0x14] sm:$0xf]
    %v88 = vld [vmem:[#allocation8 + $0x18] sm:$0xf]
    %v89 = vld [vmem:[#allocation8 + $0x1c] sm:$0xf]
    %v90 = vld [vmem:[#allocation8 + $0x20] sm:$0xf]
    %v91 = vld [vmem:[#allocation8 + $0x24] sm:$0xf]
    %v92 = vld [vmem:[#allocation8 + $0x28] sm:$0xf]
    %v93 = vld [vmem:[#allocation8 + $0x2c] sm:$0xf]
    %v94 = vld [vmem:[#allocation8 + $0x30] sm:$0xf]
    %v95 = vld [vmem:[#allocation8 + $0x34] sm:$0xf]
    %v96 = vld [vmem:[#allocation8 + $0x38] sm:$0xf]
    %v97 = vld [vmem:[#allocation8 + $0x3c] sm:$0xf]
    %v100 = vunpack.c.l.b16 %v80
    %v101 = vunpack.c.l.b16 %v81
    %v102 = vpack.c.b16 %v101, %v100
    %v120 = vunpack.c.l.b16 %v82
    %v121 = vunpack.c.l.b16 %v83
    %v122 = vunpack.c.l.b16 %v84
    %v123 = vunpack.c.l.b16 %v85
    %v124 = vunpack.c.l.b16 %v86
    %v125 = vunpack.c.l.b16 %v87
    %v126 = vunpack.c.l.b16 %v88
    %v127 = vunpack.c.l.b16 %v89
    %v128 = vunpack.c.l.b16 %v90
    %v129 = vunpack.c.l.b16 %v91
    %v130 = vunpack.c.l.b16 %v92
    %v131 = vunpack.c.l.b16 %v93
    %v132 = vunpack.c.l.b16 %v94
    %v133 = vunpack.c.l.b16 %v95
    %v134 = vunpack.c.l.b16 %v96
    %v135 = vunpack.c.l.b16 %v97
    %v136 = vpack.c.b16 %v121, %v120
    %v137 = vpack.c.b16 %v123, %v122
    %v138 = vpack.c.b16 %v125, %v124
    %v139 = vpack.c.b16 %v127, %v126
    %v140 = vpack.c.b16 %v129, %v128
    %v141 = vpack.c.b16 %v131, %v130
    %v142 = vpack.c.b16 %v133, %v132
    %v143 = vpack.c.b16 %v135, %v134
    %152 = vmatprep.subr.bf16.mxu0 0
    %153 = vmatpush1.bf16.msra.mxu0 %v143
    %154 = vmatprep.subr.bf16.mxu0 0
    %155 = vmatpush1.bf16.msra.mxu0 %v142
    %156 = vmatprep.subr.bf16.mxu0 0
    %157 = vmatpush1.bf16.msra.mxu0 %v141
    %158 = vmatprep.subr.bf16.mxu0 0
    %159 = vmatpush1.bf16.msra.mxu0 %v140
    %160 = vmatprep.subr.bf16.mxu0 0
    %161 = vmatpush1.bf16.msra.mxu0 %v139
    %162 = vmatprep.subr.bf16.mxu0 0
    %163 = vmatpush1.bf16.msra.mxu0 %v138
    %164 = vmatprep.subr.bf16.mxu0 0
    %165 = vmatpush1.bf16.msra.mxu0 %v137
    %166 = vmatprep.subr.bf16.mxu0 0
    %167 = vmatpush1.bf16.msra.mxu0 %v136
    %168 = vmatprep.subr.bf16.mxu0 0
    %169 = vmatpush2.bf16.msra.mxu0 0
    %170 = vmatprep.subr.bf16.mxu0 0
    %171 = vmatpush2.bf16.msra.mxu0 0
    %172 = vmatprep.subr.bf16.mxu0 0
    %173 = vmatpush2.bf16.msra.mxu0 0
    %174 = vmatprep.subr.bf16.mxu0 0
    %175 = vmatpush2.bf16.msra.mxu0 0
    %176 = vmatprep.subr.bf16.mxu0 0
    %177 = vmatpush2.bf16.msra.mxu0 0
    %178 = vmatprep.subr.bf16.mxu0 0
    %179 = vmatpush2.bf16.msra.mxu0 0
    %180 = vmatprep.subr.bf16.mxu0 0
    %181 = vmatpush2.bf16.msra.mxu0 0
    %182 = vmatprep.subr.bf16.mxu0 0
    %183 = vmatpush2.bf16.msra.mxu0 0
    %184 = vmatprep.mubr.bf16.mxu0 0
    %185 = vmatmul.mubr.bf16.gmra.mxu0 %v102
    %v186 = vpop.f32.mrf.mxu0
    %v187 = vadd.f32 0.0, %v186
    %v188 = vpop.f32.mrf.mxu0
    %v189 = vpop.f32.mrf.mxu0
    %v190 = vadd.f32 0.0, %v189
    %v191 = vpop.f32.mrf.mxu0
    %192 = vdwg.mxu0
    %v193 = vmax.f32 %v187, 0.0
    %v194 = vmax.f32 %v190, 0.0
    %v195 = vpack.c.bf16 %v194, %v193
    %s196 = scalar_lea.vmem [#allocation8], 64
    %v197 = vld [vmem:[%s196] sm:$0xf]
    %v198 = vld [vmem:[%s196 + $0x4] sm:$0xf]
    %v199 = vld [vmem:[%s196 + $0x8] sm:$0xf]
    %v200 = vld [vmem:[%s196 + $0xc] sm:$0xf]
    %v201 = vld [vmem:[%s196 + $0x10] sm:$0xf]
    %v202 = vld [vmem:[%s196 + $0x14] sm:$0xf]
    %v203 = vld [vmem:[%s196 + $0x18] sm:$0xf]
    %v204 = vld [vmem:[%s196 + $0x1c] sm:$0xf]
    %v205 = vld [vmem:[%s196 + $0x20] sm:$0xf]
    %v206 = vld [vmem:[%s196 + $0x24] sm:$0xf]
    %v207 = vld [vmem:[%s196 + $0x28] sm:$0xf]
    %v208 = vld [vmem:[%s196 + $0x2c] sm:$0xf]
    %v209 = vld [vmem:[%s196 + $0x30] sm:$0xf]
    %v210 = vld [vmem:[%s196 + $0x34] sm:$0xf]
    %v211 = vld [vmem:[%s196 + $0x38] sm:$0xf]
    %v212 = vld [vmem:[%s196 + $0x3c] sm:$0xf]
    %v229 = vunpack.c.l.b16 %v197
    %v230 = vunpack.c.l.b16 %v198
    %v231 = vunpack.c.l.b16 %v199
    %v232 = vunpack.c.l.b16 %v200
    %v233 = vunpack.c.l.b16 %v201
    %v234 = vunpack.c.l.b16 %v202
    %v235 = vunpack.c.l.b16 %v203
    %v236 = vunpack.c.l.b16 %v204
    %v237 = vunpack.c.l.b16 %v205
    %v238 = vunpack.c.l.b16 %v206
    %v239 = vunpack.c.l.b16 %v207
    %v240 = vunpack.c.l.b16 %v208
    %v241 = vunpack.c.l.b16 %v209
    %v242 = vunpack.c.l.b16 %v210
    %v243 = vunpack.c.l.b16 %v211
    %v244 = vunpack.c.l.b16 %v212
    %v245 = vpack.c.b16 %v230, %v229
    %v246 = vpack.c.b16 %v232, %v231
    %v247 = vpack.c.b16 %v234, %v233
    %v248 = vpack.c.b16 %v236, %v235
    %v249 = vpack.c.b16 %v238, %v237
    %v250 = vpack.c.b16 %v240, %v239
    %v251 = vpack.c.b16 %v242, %v241
    %v252 = vpack.c.b16 %v244, %v243
    %261 = vmatprep.subr.bf16.mxu0 0
    %262 = vmatpush1.bf16.msra.mxu0 %v252
    %263 = vmatprep.subr.bf16.mxu0 0
    %264 = vmatpush1.bf16.msra.mxu0 %v251
    %265 = vmatprep.subr.bf16.mxu0 0
    %266 = vmatpush1.bf16.msra.mxu0 %v250
    %267 = vmatprep.subr.bf16.mxu0 0
    %268 = vmatpush1.bf16.msra.mxu0 %v249
    %269 = vmatprep.subr.bf16.mxu0 0
    %270 = vmatpush1.bf16.msra.mxu0 %v248
    %271 = vmatprep.subr.bf16.mxu0 0
    %272 = vmatpush1.bf16.msra.mxu0 %v247
    %273 = vmatprep.subr.bf16.mxu0 0
    %274 = vmatpush1.bf16.msra.mxu0 %v246
    %275 = vmatprep.subr.bf16.mxu0 0
    %276 = vmatpush1.bf16.msra.mxu0 %v245
    %277 = vmatprep.subr.bf16.mxu0 0
    %278 = vmatpush2.bf16.msra.mxu0 0
    %279 = vmatprep.subr.bf16.mxu0 0
    %280 = vmatpush2.bf16.msra.mxu0 0
    %281 = vmatprep.subr.bf16.mxu0 0
    %282 = vmatpush2.bf16.msra.mxu0 0
    %283 = vmatprep.subr.bf16.mxu0 0
    %284 = vmatpush2.bf16.msra.mxu0 0
    %285 = vmatprep.subr.bf16.mxu0 0
    %286 = vmatpush2.bf16.msra.mxu0 0
    %287 = vmatprep.subr.bf16.mxu0 0
    %288 = vmatpush2.bf16.msra.mxu0 0
    %289 = vmatprep.subr.bf16.mxu0 0
    %290 = vmatpush2.bf16.msra.mxu0 0
    %291 = vmatprep.subr.bf16.mxu0 0
    %292 = vmatpush2.bf16.msra.mxu0 0
    %293 = vmatprep.mubr.bf16.mxu0 0
    %294 = vmatmul.mubr.bf16.gmra.mxu0 %v195
    %v295 = vpop.f32.mrf.mxu0
    %v296 = vadd.f32 0.0, %v295
    %v297 = vpop.f32.mrf.mxu0
    %v298 = vpop.f32.mrf.mxu0
    %v299 = vadd.f32 0.0, %v298
    %v300 = vpop.f32.mrf.mxu0
    %301 = vdwg.mxu0
    %v302 = vmax.f32 %v296, 0.0
    %v303 = vmax.f32 %v299, 0.0
    %v304 = vpack.c.bf16 %v303, %v302
    %s305 = scalar_lea.vmem [#allocation8], 128
    %v306 = vld [vmem:[%s305] sm:$0xf]
    %v307 = vld [vmem:[%s305 + $0x4] sm:$0xf]
    %v308 = vld [vmem:[%s305 + $0x8] sm:$0xf]
    %v309 = vld [vmem:[%s305 + $0xc] sm:$0xf]
    %v310 = vld [vmem:[%s305 + $0x10] sm:$0xf]
    %v311 = vld [vmem:[%s305 + $0x14] sm:$0xf]
    %v312 = vld [vmem:[%s305 + $0x18] sm:$0xf]
    %v313 = vld [vmem:[%s305 + $0x1c] sm:$0xf]
    %v314 = vld [vmem:[%s305 + $0x20] sm:$0xf]
    %v315 = vld [vmem:[%s305 + $0x24] sm:$0xf]
    %v316 = vld [vmem:[%s305 + $0x28] sm:$0xf]
    %v317 = vld [vmem:[%s305 + $0x2c] sm:$0xf]
    %v318 = vld [vmem:[%s305 + $0x30] sm:$0xf]
    %v319 = vld [vmem:[%s305 + $0x34] sm:$0xf]
    %v320 = vld [vmem:[%s305 + $0x38] sm:$0xf]
    %v321 = vld [vmem:[%s305 + $0x3c] sm:$0xf]
    %v338 = vunpack.c.l.b16 %v306
    %v339 = vunpack.c.l.b16 %v307
    %v340 = vunpack.c.l.b16 %v308
    %v341 = vunpack.c.l.b16 %v309
    %v342 = vunpack.c.l.b16 %v310
    %v343 = vunpack.c.l.b16 %v311
    %v344 = vunpack.c.l.b16 %v312
    %v345 = vunpack.c.l.b16 %v313
    %v346 = vunpack.c.l.b16 %v314
    %v347 = vunpack.c.l.b16 %v315
    %v348 = vunpack.c.l.b16 %v316
    %v349 = vunpack.c.l.b16 %v317
    %v350 = vunpack.c.l.b16 %v318
    %v351 = vunpack.c.l.b16 %v319
    %v352 = vunpack.c.l.b16 %v320
    %v353 = vunpack.c.l.b16 %v321
    %v354 = vpack.c.b16 %v339, %v338
    %v355 = vpack.c.b16 %v341, %v340
    %v356 = vpack.c.b16 %v343, %v342
    %v357 = vpack.c.b16 %v345, %v344
    %v358 = vpack.c.b16 %v347, %v346
    %v359 = vpack.c.b16 %v349, %v348
    %v360 = vpack.c.b16 %v351, %v350
    %v361 = vpack.c.b16 %v353, %v352
    %370 = vmatprep.subr.bf16.mxu0 0
    %371 = vmatpush1.bf16.msra.mxu0 %v361
    %372 = vmatprep.subr.bf16.mxu0 0
    %373 = vmatpush1.bf16.msra.mxu0 %v360
    %374 = vmatprep.subr.bf16.mxu0 0
    %375 = vmatpush1.bf16.msra.mxu0 %v359
    %376 = vmatprep.subr.bf16.mxu0 0
    %377 = vmatpush1.bf16.msra.mxu0 %v358
    %378 = vmatprep.subr.bf16.mxu0 0
    %379 = vmatpush1.bf16.msra.mxu0 %v357
    %380 = vmatprep.subr.bf16.mxu0 0
    %381 = vmatpush1.bf16.msra.mxu0 %v356
    %382 = vmatprep.subr.bf16.mxu0 0
    %383 = vmatpush1.bf16.msra.mxu0 %v355
    %384 = vmatprep.subr.bf16.mxu0 0
    %385 = vmatpush1.bf16.msra.mxu0 %v354
    %386 = vmatprep.subr.bf16.mxu0 0
    %387 = vmatpush2.bf16.msra.mxu0 0
    %388 = vmatprep.subr.bf16.mxu0 0
    %389 = vmatpush2.bf16.msra.mxu0 0
    %390 = vmatprep.subr.bf16.mxu0 0
    %391 = vmatpush2.bf16.msra.mxu0 0
    %392 = vmatprep.subr.bf16.mxu0 0
    %393 = vmatpush2.bf16.msra.mxu0 0
    %394 = vmatprep.subr.bf16.mxu0 0
    %395 = vmatpush2.bf16.msra.mxu0 0
    %396 = vmatprep.subr.bf16.mxu0 0
    %397 = vmatpush2.bf16.msra.mxu0 0
    %398 = vmatprep.subr.bf16.mxu0 0
    %399 = vmatpush2.bf16.msra.mxu0 0
    %400 = vmatprep.subr.bf16.mxu0 0
    %401 = vmatpush2.bf16.msra.mxu0 0
    %402 = vmatprep.mubr.bf16.mxu0 0
    %403 = vmatmul.mubr.bf16.gmra.mxu0 %v304
    %v404 = vpop.f32.mrf.mxu0
    %v405 = vadd.f32 0.0, %v404
    %v406 = vpop.f32.mrf.mxu0
    %v407 = vpop.f32.mrf.mxu0
    %v408 = vadd.f32 0.0, %v407
    %v409 = vpop.f32.mrf.mxu0
    %410 = vdwg.mxu0
    %v411 = vmax.f32 %v405, 0.0
    %v412 = vmax.f32 %v408, 0.0
    %v413 = vpack.c.bf16 %v412, %v411
    %s414 = scalar_lea.vmem [#allocation8], 192
    %v415 = vld [vmem:[%s414] sm:$0xf]
    %v416 = vld [vmem:[%s414 + $0x4] sm:$0xf]
    %v417 = vld [vmem:[%s414 + $0x8] sm:$0xf]
    %v418 = vld [vmem:[%s414 + $0xc] sm:$0xf]
    %v419 = vld [vmem:[%s414 + $0x10] sm:$0xf]
    %v420 = vld [vmem:[%s414 + $0x14] sm:$0xf]
    %v421 = vld [vmem:[%s414 + $0x18] sm:$0xf]
    %v422 = vld [vmem:[%s414 + $0x1c] sm:$0xf]
    %v423 = vld [vmem:[%s414 + $0x20] sm:$0xf]
    %v424 = vld [vmem:[%s414 + $0x24] sm:$0xf]
    %v425 = vld [vmem:[%s414 + $0x28] sm:$0xf]
    %v426 = vld [vmem:[%s414 + $0x2c] sm:$0xf]
    %v427 = vld [vmem:[%s414 + $0x30] sm:$0xf]
    %v428 = vld [vmem:[%s414 + $0x34] sm:$0xf]
    %v429 = vld [vmem:[%s414 + $0x38] sm:$0xf]
    %v430 = vld [vmem:[%s414 + $0x3c] sm:$0xf]
    %v447 = vunpack.c.l.b16 %v415
    %v448 = vunpack.c.l.b16 %v416
    %v449 = vunpack.c.l.b16 %v417
    %v450 = vunpack.c.l.b16 %v418
    %v451 = vunpack.c.l.b16 %v419
    %v452 = vunpack.c.l.b16 %v420
    %v453 = vunpack.c.l.b16 %v421
    %v454 = vunpack.c.l.b16 %v422
    %v455 = vunpack.c.l.b16 %v423
    %v456 = vunpack.c.l.b16 %v424
    %v457 = vunpack.c.l.b16 %v425
    %v458 = vunpack.c.l.b16 %v426
    %v459 = vunpack.c.l.b16 %v427
    %v460 = vunpack.c.l.b16 %v428
    %v461 = vunpack.c.l.b16 %v429
    %v462 = vunpack.c.l.b16 %v430
    %v463 = vpack.c.b16 %v448, %v447
    %v464 = vpack.c.b16 %v450, %v449
    %v465 = vpack.c.b16 %v452, %v451
    %v466 = vpack.c.b16 %v454, %v453
    %v467 = vpack.c.b16 %v456, %v455
    %v468 = vpack.c.b16 %v458, %v457
    %v469 = vpack.c.b16 %v460, %v459
    %v470 = vpack.c.b16 %v462, %v461
    %479 = vmatprep.subr.bf16.mxu0 0
    %480 = vmatpush1.bf16.msra.mxu0 %v470
    %481 = vmatprep.subr.bf16.mxu0 0
    %482 = vmatpush1.bf16.msra.mxu0 %v469
    %483 = vmatprep.subr.bf16.mxu0 0
    %484 = vmatpush1.bf16.msra.mxu0 %v468
    %485 = vmatprep.subr.bf16.mxu0 0
    %486 = vmatpush1.bf16.msra.mxu0 %v467
    %487 = vmatprep.subr.bf16.mxu0 0
    %488 = vmatpush1.bf16.msra.mxu0 %v466
    %489 = vmatprep.subr.bf16.mxu0 0
    %490 = vmatpush1.bf16.msra.mxu0 %v465
    %491 = vmatprep.subr.bf16.mxu0 0
    %492 = vmatpush1.bf16.msra.mxu0 %v464
    %493 = vmatprep.subr.bf16.mxu0 0
    %494 = vmatpush1.bf16.msra.mxu0 %v463
    %495 = vmatprep.subr.bf16.mxu0 0
    %496 = vmatpush2.bf16.msra.mxu0 0
    %497 = vmatprep.subr.bf16.mxu0 0
    %498 = vmatpush2.bf16.msra.mxu0 0
    %499 = vmatprep.subr.bf16.mxu0 0
    %500 = vmatpush2.bf16.msra.mxu0 0
    %501 = vmatprep.subr.bf16.mxu0 0
    %502 = vmatpush2.bf16.msra.mxu0 0
    %503 = vmatprep.subr.bf16.mxu0 0
    %504 = vmatpush2.bf16.msra.mxu0 0
    %505 = vmatprep.subr.bf16.mxu0 0
    %506 = vmatpush2.bf16.msra.mxu0 0
    %507 = vmatprep.subr.bf16.mxu0 0
    %508 = vmatpush2.bf16.msra.mxu0 0
    %509 = vmatprep.subr.bf16.mxu0 0
    %510 = vmatpush2.bf16.msra.mxu0 0
    %511 = vmatprep.mubr.bf16.mxu0 0
    %512 = vmatmul.mubr.bf16.gmra.mxu0 %v413
    %v513 = vpop.f32.mrf.mxu0
    %v514 = vadd.f32 0.0, %v513
    %v515 = vpop.f32.mrf.mxu0
    %v516 = vpop.f32.mrf.mxu0
    %v517 = vadd.f32 0.0, %v516
    %v518 = vpop.f32.mrf.mxu0
    %519 = vdwg.mxu0
    %v520 = vmax.f32 %v514, 0.0
    %v521 = vmax.f32 %v517, 0.0
    %v522 = vpack.c.bf16 %v521, %v520
    %v523 = vld [vmem:[#allocation2] sm:$0xff]
    %v524 = vld [vmem:[#allocation2 + $0x8] sm:$0xff]
    %v525 = vld [vmem:[#allocation6] sm:$0xf]
    %v526 = vld [vmem:[#allocation6 + $0x4] sm:$0xf]
    %v529 = vunpack.c.l.b16 %v525
    %v530 = vunpack.c.l.b16 %v526
    %v531 = vpack.c.b16 %v530, %v529
    %vm532 = vcmask 130048
    %v534 = vsel %vm532, %v531, 0
    %536 = vmatprep.subr.bf16.mxu0 0
    %537 = vmatpush1.bf16.msra.mxu0 0
    %538 = vmatprep.subr.bf16.mxu0 0
    %539 = vmatpush1.bf16.msra.mxu0 0
    %540 = vmatprep.subr.bf16.mxu0 0
    %541 = vmatpush1.bf16.msra.mxu0 0
    %542 = vmatprep.subr.bf16.mxu0 0
    %543 = vmatpush1.bf16.msra.mxu0 0
    %544 = vmatprep.subr.bf16.mxu0 0
    %545 = vmatpush1.bf16.msra.mxu0 0
    %546 = vmatprep.subr.bf16.mxu0 0
    %547 = vmatpush1.bf16.msra.mxu0 0
    %548 = vmatprep.subr.bf16.mxu0 0
    %549 = vmatpush1.bf16.msra.mxu0 0
    %550 = vmatprep.subr.bf16.mxu0 0
    %551 = vmatpush1.bf16.msra.mxu0 %v522
    %552 = vmatprep.subr.bf16.mxu0 0
    %553 = vmatpush2.bf16.msra.mxu0 0
    %554 = vmatprep.subr.bf16.mxu0 0
    %555 = vmatpush2.bf16.msra.mxu0 0
    %556 = vmatprep.subr.bf16.mxu0 0
    %557 = vmatpush2.bf16.msra.mxu0 0
    %558 = vmatprep.subr.bf16.mxu0 0
    %559 = vmatpush2.bf16.msra.mxu0 0
    %560 = vmatprep.subr.bf16.mxu0 0
    %561 = vmatpush2.bf16.msra.mxu0 0
    %562 = vmatprep.subr.bf16.mxu0 0
    %563 = vmatpush2.bf16.msra.mxu0 0
    %564 = vmatprep.subr.bf16.mxu0 0
    %565 = vmatpush2.bf16.msra.mxu0 0
    %566 = vmatprep.subr.bf16.mxu0 0
    %567 = vmatpush2.bf16.msra.mxu0 0
    %568 = vmatprep.mubr.bf16.mxu0 0
    %569 = vmatmul.mubr.bf16.gmra.mxu0 %v534
    %v570 = vpop.f32.mrf.mxu0
    %v571 = vadd.f32 0.0, %v570
    %v572 = vpop.f32.mrf.mxu0
    %v573 = vpop.f32.mrf.mxu0
    %v574 = vadd.f32 0.0, %v573
    %v575 = vpop.f32.mrf.mxu0
    %576 = vdwg.mxu0
    %v577 = vadd.f32 %v523, %v571
    %v578 = vadd.f32 %v524, %v574
    %579 = vst [vmem:[#allocation2] sm:$0xff] %v577
    %580 = vst [vmem:[#allocation2 + $0x8] sm:$0xff] %v578
    // Predicated region
    $region38: #{tpu_custom_call.1} parent=1 // pred_check
      %p581 = pneg %p74
    $region39: #{tpu_custom_call.1} parent=1 // pred_check_branch
      %583 = sbr.rel (%p581) target = $region41
    $region40: #{tpu_custom_call.1} parent=1 // pred_region
      %v584 = vld [vmem:[#allocation2] sm:$0xff]
      %v585 = vld [vmem:[#allocation2 + $0x8] sm:$0xff]
      %v586 = vpack.c.bf16 %v585, %v584
      %v587 = vld [vmem:[#allocation9] sm:$0xff]
      %v588 = vld [vmem:[#allocation9 + $0x8] sm:$0xff]
      %v589 = vld [vmem:[#allocation9 + $0x10] sm:$0xff]
      %v590 = vld [vmem:[#allocation9 + $0x18] sm:$0xff]
      %v591 = vld [vmem:[#allocation9 + $0x20] sm:$0xff]
      %v592 = vld [vmem:[#allocation9 + $0x28] sm:$0xff]
      %v593 = vld [vmem:[#allocation9 + $0x30] sm:$0xff]
      %v594 = vld [vmem:[#allocation9 + $0x38] sm:$0xff]
      %v595 = vld [vmem:[#allocation9 + $0x40] sm:$0xff]
      %v596 = vld [vmem:[#allocation9 + $0x48] sm:$0xff]
      %v597 = vld [vmem:[#allocation9 + $0x50] sm:$0xff]
      %v598 = vld [vmem:[#allocation9 + $0x58] sm:$0xff]
      %v599 = vld [vmem:[#allocation9 + $0x60] sm:$0xff]
      %v600 = vld [vmem:[#allocation9 + $0x68] sm:$0xff]
      %v601 = vld [vmem:[#allocation9 + $0x70] sm:$0xff]
      %v602 = vld [vmem:[#allocation9 + $0x78] sm:$0xff]
      %v619 = vunpack.c.l.b16 %v587
      %v620 = vunpack.c.h.b16 %v587
      %v621 = vunpack.c.l.b16 %v588
      %v622 = vunpack.c.h.b16 %v588
      %v623 = vunpack.c.l.b16 %v589
      %v624 = vunpack.c.h.b16 %v589
      %v625 = vunpack.c.l.b16 %v590
      %v626 = vunpack.c.h.b16 %v590
      %v627 = vunpack.c.l.b16 %v591
      %v628 = vunpack.c.h.b16 %v591
      %v629 = vunpack.c.l.b16 %v592
      %v630 = vunpack.c.h.b16 %v592
      %v631 = vunpack.c.l.b16 %v593
      %v632 = vunpack.c.h.b16 %v593
      %v633 = vunpack.c.l.b16 %v594
      %v634 = vunpack.c.h.b16 %v594
      %v635 = vunpack.c.l.b16 %v595
      %v636 = vunpack.c.h.b16 %v595
      %v637 = vunpack.c.l.b16 %v596
      %v638 = vunpack.c.h.b16 %v596
      %v639 = vunpack.c.l.b16 %v597
      %v640 = vunpack.c.h.b16 %v597
      %v641 = vunpack.c.l.b16 %v598
      %v642 = vunpack.c.h.b16 %v598
      %v643 = vunpack.c.l.b16 %v599
      %v644 = vunpack.c.h.b16 %v599
      %v645 = vunpack.c.l.b16 %v600
      %v646 = vunpack.c.h.b16 %v600
      %v647 = vunpack.c.l.b16 %v601
      %v648 = vunpack.c.h.b16 %v601
      %v649 = vunpack.c.l.b16 %v602
      %v650 = vunpack.c.h.b16 %v602
      %v651 = vpack.c.b16 %v621, %v619
      %v652 = vpack.c.b16 %v622, %v620
      %v653 = vpack.c.b16 %v625, %v623
      %v654 = vpack.c.b16 %v626, %v624
      %v655 = vpack.c.b16 %v629, %v627
      %v656 = vpack.c.b16 %v630, %v628
      %v657 = vpack.c.b16 %v633, %v631
      %v658 = vpack.c.b16 %v634, %v632
      %v659 = vpack.c.b16 %v637, %v635
      %v660 = vpack.c.b16 %v638, %v636
      %v661 = vpack.c.b16 %v641, %v639
      %v662 = vpack.c.b16 %v642, %v640
      %v663 = vpack.c.b16 %v645, %v643
      %v664 = vpack.c.b16 %v646, %v644
      %v665 = vpack.c.b16 %v649, %v647
      %v666 = vpack.c.b16 %v650, %v648
      %683 = vmatprep.subr.bf16.mxu0 %v666
      %684 = vmatpush1.bf16.msra.mxu0 %v665
      %685 = vmatprep.subr.bf16.mxu0 %v664
      %686 = vmatpush1.bf16.msra.mxu0 %v663
      %687 = vmatprep.subr.bf16.mxu0 %v662
      %688 = vmatpush1.bf16.msra.mxu0 %v661
      %689 = vmatprep.subr.bf16.mxu0 %v660
      %690 = vmatpush1.bf16.msra.mxu0 %v659
      %691 = vmatprep.subr.bf16.mxu0 %v658
      %692 = vmatpush1.bf16.msra.mxu0 %v657
      %693 = vmatprep.subr.bf16.mxu0 %v656
      %694 = vmatpush1.bf16.msra.mxu0 %v655
      %695 = vmatprep.subr.bf16.mxu0 %v654
      %696 = vmatpush1.bf16.msra.mxu0 %v653
      %697 = vmatprep.subr.bf16.mxu0 %v652
      %698 = vmatpush1.bf16.msra.mxu0 %v651
      %699 = vmatprep.subr.bf16.mxu0 0
      %700 = vmatpush2.bf16.msra.mxu0 0
      %701 = vmatprep.subr.bf16.mxu0 0
      %702 = vmatpush2.bf16.msra.mxu0 0
      %703 = vmatprep.subr.bf16.mxu0 0
      %704 = vmatpush2.bf16.msra.mxu0 0
      %705 = vmatprep.subr.bf16.mxu0 0
      %706 = vmatpush2.bf16.msra.mxu0 0
      %707 = vmatprep.subr.bf16.mxu0 0
      %708 = vmatpush2.bf16.msra.mxu0 0
      %709 = vmatprep.subr.bf16.mxu0 0
      %710 = vmatpush2.bf16.msra.mxu0 0
      %711 = vmatprep.subr.bf16.mxu0 0
      %712 = vmatpush2.bf16.msra.mxu0 0
      %713 = vmatprep.subr.bf16.mxu0 0
      %714 = vmatpush2.bf16.msra.mxu0 0
      %715 = vmatprep.mubr.bf16.mxu0 0
      %716 = vmatmul.mubr.bf16.gmra.mxu0 %v586
      %v717 = vpop.f32.mrf.mxu0
      %v718 = vadd.f32 0.0, %v717
      %v719 = vpop.f32.mrf.mxu0
      %v720 = vadd.f32 0.0, %v719
      %v721 = vpop.f32.mrf.mxu0
      %v722 = vadd.f32 0.0, %v721
      %v723 = vpop.f32.mrf.mxu0
      %v724 = vadd.f32 0.0, %v723
      %725 = vdwg.mxu0
      %v726 = vmax.f32 %v718, %v720
      %v727 = vmax.f32 %v722, %v724
      %v728 = vmax.f32 %v726, 0.0
      %v729 = vmax.f32 %v727, 0.0
      %v730 = vpack.c.bf16 %v729, %v728
      %s731 = scalar_lea.vmem [#allocation8], 256
      %v732 = vld [vmem:[%s731] sm:$0xf]
      %v733 = vld [vmem:[%s731 + $0x4] sm:$0xf]
      %v734 = vld [vmem:[%s731 + $0x8] sm:$0xf]
      %v735 = vld [vmem:[%s731 + $0xc] sm:$0xf]
      %v736 = vld [vmem:[%s731 + $0x10] sm:$0xf]
      %v737 = vld [vmem:[%s731 + $0x14] sm:$0xf]
      %v738 = vld [vmem:[%s731 + $0x18] sm:$0xf]
      %v739 = vld [vmem:[%s731 + $0x1c] sm:$0xf]
      %v740 = vld [vmem:[%s731 + $0x20] sm:$0xf]
      %v741 = vld [vmem:[%s731 + $0x24] sm:$0xf]
      %v742 = vld [vmem:[%s731 + $0x28] sm:$0xf]
      %v743 = vld [vmem:[%s731 + $0x2c] sm:$0xf]
      %v744 = vld [vmem:[%s731 + $0x30] sm:$0xf]
      %v745 = vld [vmem:[%s731 + $0x34] sm:$0xf]
      %v746 = vld [vmem:[%s731 + $0x38] sm:$0xf]
      %v747 = vld [vmem:[%s731 + $0x3c] sm:$0xf]
      %v764 = vunpack.c.l.b16 %v732
      %v765 = vunpack.c.l.b16 %v733
      %v766 = vunpack.c.l.b16 %v734
      %v767 = vunpack.c.l.b16 %v735
      %v768 = vunpack.c.l.b16 %v736
      %v769 = vunpack.c.l.b16 %v737
      %v770 = vunpack.c.l.b16 %v738
      %v771 = vunpack.c.l.b16 %v739
      %v772 = vunpack.c.l.b16 %v740
      %v773 = vunpack.c.l.b16 %v741
      %v774 = vunpack.c.l.b16 %v742
      %v775 = vunpack.c.l.b16 %v743
      %v776 = vunpack.c.l.b16 %v744
      %v777 = vunpack.c.l.b16 %v745
      %v778 = vunpack.c.l.b16 %v746
      %v779 = vunpack.c.l.b16 %v747
      %v780 = vpack.c.b16 %v765, %v764
      %v781 = vpack.c.b16 %v767, %v766
      %v782 = vpack.c.b16 %v769, %v768
      %v783 = vpack.c.b16 %v771, %v770
      %v784 = vpack.c.b16 %v773, %v772
      %v785 = vpack.c.b16 %v775, %v774
      %v786 = vpack.c.b16 %v777, %v776
      %v787 = vpack.c.b16 %v779, %v778
      %796 = vmatprep.subr.bf16.mxu0 0
      %797 = vmatpush1.bf16.msra.mxu0 %v787
      %798 = vmatprep.subr.bf16.mxu0 0
      %799 = vmatpush1.bf16.msra.mxu0 %v786
      %800 = vmatprep.subr.bf16.mxu0 0
      %801 = vmatpush1.bf16.msra.mxu0 %v785
      %802 = vmatprep.subr.bf16.mxu0 0
      %803 = vmatpush1.bf16.msra.mxu0 %v784
      %804 = vmatprep.subr.bf16.mxu0 0
      %805 = vmatpush1.bf16.msra.mxu0 %v783
      %806 = vmatprep.subr.bf16.mxu0 0
      %807 = vmatpush1.bf16.msra.mxu0 %v782
      %808 = vmatprep.subr.bf16.mxu0 0
      %809 = vmatpush1.bf16.msra.mxu0 %v781
      %810 = vmatprep.subr.bf16.mxu0 0
      %811 = vmatpush1.bf16.msra.mxu0 %v780
      %812 = vmatprep.subr.bf16.mxu0 0
      %813 = vmatpush2.bf16.msra.mxu0 0
      %814 = vmatprep.subr.bf16.mxu0 0
      %815 = vmatpush2.bf16.msra.mxu0 0
      %816 = vmatprep.subr.bf16.mxu0 0
      %817 = vmatpush2.bf16.msra.mxu0 0
      %818 = vmatprep.subr.bf16.mxu0 0
      %819 = vmatpush2.bf16.msra.mxu0 0
      %820 = vmatprep.subr.bf16.mxu0 0
      %821 = vmatpush2.bf16.msra.mxu0 0
      %822 = vmatprep.subr.bf16.mxu0 0
      %823 = vmatpush2.bf16.msra.mxu0 0
      %824 = vmatprep.subr.bf16.mxu0 0
      %825 = vmatpush2.bf16.msra.mxu0 0
      %826 = vmatprep.subr.bf16.mxu0 0
      %827 = vmatpush2.bf16.msra.mxu0 0
      %828 = vmatprep.mubr.bf16.mxu0 0
      %829 = vmatmul.mubr.bf16.gmra.mxu0 %v730
      %v830 = vpop.f32.mrf.mxu0
      %v831 = vadd.f32 0.0, %v830
      %v832 = vpop.f32.mrf.mxu0
      %v833 = vpop.f32.mrf.mxu0
      %v834 = vadd.f32 0.0, %v833
      %v835 = vpop.f32.mrf.mxu0
      %836 = vdwg.mxu0
      %v837 = vmax.f32 %v831, 0.0
      %v838 = vmax.f32 %v834, 0.0
      %v839 = vpack.c.bf16 %v838, %v837
      %s840 = scalar_lea.vmem [#allocation8], 320
      %v841 = vld [vmem:[%s840] sm:$0xf]
      %v842 = vld [vmem:[%s840 + $0x4] sm:$0xf]
      %v843 = vld [vmem:[%s840 + $0x8] sm:$0xf]
      %v844 = vld [vmem:[%s840 + $0xc] sm:$0xf]
      %v845 = vld [vmem:[%s840 + $0x10] sm:$0xf]
      %v846 = vld [vmem:[%s840 + $0x14] sm:$0xf]
      %v847 = vld [vmem:[%s840 + $0x18] sm:$0xf]
      %v848 = vld [vmem:[%s840 + $0x1c] sm:$0xf]
      %v849 = vld [vmem:[%s840 + $0x20] sm:$0xf]
      %v850 = vld [vmem:[%s840 + $0x24] sm:$0xf]
      %v851 = vld [vmem:[%s840 + $0x28] sm:$0xf]
      %v852 = vld [vmem:[%s840 + $0x2c] sm:$0xf]
      %v853 = vld [vmem:[%s840 + $0x30] sm:$0xf]
      %v854 = vld [vmem:[%s840 + $0x34] sm:$0xf]
      %v855 = vld [vmem:[%s840 + $0x38] sm:$0xf]
      %v856 = vld [vmem:[%s840 + $0x3c] sm:$0xf]
      %v873 = vunpack.c.l.b16 %v841
      %v874 = vunpack.c.l.b16 %v842
      %v875 = vunpack.c.l.b16 %v843
      %v876 = vunpack.c.l.b16 %v844
      %v877 = vunpack.c.l.b16 %v845
      %v878 = vunpack.c.l.b16 %v846
      %v879 = vunpack.c.l.b16 %v847
      %v880 = vunpack.c.l.b16 %v848
      %v881 = vunpack.c.l.b16 %v849
      %v882 = vunpack.c.l.b16 %v850
      %v883 = vunpack.c.l.b16 %v851
      %v884 = vunpack.c.l.b16 %v852
      %v885 = vunpack.c.l.b16 %v853
      %v886 = vunpack.c.l.b16 %v854
      %v887 = vunpack.c.l.b16 %v855
      %v888 = vunpack.c.l.b16 %v856
      %v889 = vpack.c.b16 %v874, %v873
      %v890 = vpack.c.b16 %v876, %v875
      %v891 = vpack.c.b16 %v878, %v877
      %v892 = vpack.c.b16 %v880, %v879
      %v893 = vpack.c.b16 %v882, %v881
      %v894 = vpack.c.b16 %v884, %v883
      %v895 = vpack.c.b16 %v886, %v885
      %v896 = vpack.c.b16 %v888, %v887
      %905 = vmatprep.subr.bf16.mxu0 0
      %906 = vmatpush1.bf16.msra.mxu0 %v896
      %907 = vmatprep.subr.bf16.mxu0 0
      %908 = vmatpush1.bf16.msra.mxu0 %v895
      %909 = vmatprep.subr.bf16.mxu0 0
      %910 = vmatpush1.bf16.msra.mxu0 %v894
      %911 = vmatprep.subr.bf16.mxu0 0
      %912 = vmatpush1.bf16.msra.mxu0 %v893
      %913 = vmatprep.subr.bf16.mxu0 0
      %914 = vmatpush1.bf16.msra.mxu0 %v892
      %915 = vmatprep.subr.bf16.mxu0 0
      %916 = vmatpush1.bf16.msra.mxu0 %v891
      %917 = vmatprep.subr.bf16.mxu0 0
      %918 = vmatpush1.bf16.msra.mxu0 %v890
      %919 = vmatprep.subr.bf16.mxu0 0
      %920 = vmatpush1.bf16.msra.mxu0 %v889
      %921 = vmatprep.subr.bf16.mxu0 0
      %922 = vmatpush2.bf16.msra.mxu0 0
      %923 = vmatprep.subr.bf16.mxu0 0
      %924 = vmatpush2.bf16.msra.mxu0 0
      %925 = vmatprep.subr.bf16.mxu0 0
      %926 = vmatpush2.bf16.msra.mxu0 0
      %927 = vmatprep.subr.bf16.mxu0 0
      %928 = vmatpush2.bf16.msra.mxu0 0
      %929 = vmatprep.subr.bf16.mxu0 0
      %930 = vmatpush2.bf16.msra.mxu0 0
      %931 = vmatprep.subr.bf16.mxu0 0
      %932 = vmatpush2.bf16.msra.mxu0 0
      %933 = vmatprep.subr.bf16.mxu0 0
      %934 = vmatpush2.bf16.msra.mxu0 0
      %935 = vmatprep.subr.bf16.mxu0 0
      %936 = vmatpush2.bf16.msra.mxu0 0
      %937 = vmatprep.mubr.bf16.mxu0 0
      %938 = vmatmul.mubr.bf16.gmra.mxu0 %v839
      %v939 = vpop.f32.mrf.mxu0
      %v940 = vadd.f32 0.0, %v939
      %v941 = vpop.f32.mrf.mxu0
      %v942 = vpop.f32.mrf.mxu0
      %v943 = vadd.f32 0.0, %v942
      %v944 = vpop.f32.mrf.mxu0
      %945 = vdwg.mxu0
      %946 = vst [vmem:[#allocation11] sm:$0xff] %v940
      %947 = vst [vmem:[#allocation11 + $0x8] sm:$0xff] %v943
    $region41: #{tpu_custom_call.1} parent=1 // pred_fallthru
      _
    // Predicated region
    $region42: #{tpu_custom_call.1} parent=1 // pred_check
      _
    $region43: #{tpu_custom_call.1} parent=1 // pred_check_branch
      %949 = sbr.rel (0) target = $region45
    $region44: #{tpu_custom_call.1} parent=1 // pred_region
      %s951 = ssub.s32 256, 256
      %952 = vsyncadd [#allocation5], %s951
      %s953 = sshll.u32 [#allocation11], 4
      %s954 = int_to_ptr.vmem [resolvable:$true] %s953
      %959 = dma.vmem_to_hbm [thread:$0]  %s954, 256, %s4, [#allocation5], 128, 128, 8
    $region45: #{tpu_custom_call.1} parent=1 // pred_fallthru
      _
    // Predicated region
    $region46: #{tpu_custom_call.1} parent=1 // pred_check
      _
    $region47: #{tpu_custom_call.1} parent=1 // pred_check_branch
      %961 = sbr.rel (0) target = $region49
    $region48: #{tpu_custom_call.1} parent=1 // pred_region
      %962 = dma.done [#allocation5], 256
    $region49: #{tpu_custom_call.1} parent=1 // pred_fallthru
      _
    %963 = vsyncpa [#allocation4], 1
    %964 = vsyncpa [#allocation7], 1
    %965 = vsyncpa [#allocation10], 1
    %966 = vsyncpa [#allocation5], 1

</llo_original>
